<compile_context>
chip_gen: v7x
topology: tpu7x:2x2x1
jax: 0.10.0
libtpu: 0.0.40
codegen_flags: <defaults>
</compile_context>

<pallas_src>
import jax
import jax.numpy as jnp
from jax.experimental import pallas as pl
from jax.experimental.pallas import tpu as pltpu

BN_EPS = 1e-3  # BatchNorm2d(176, eps=0.001)


def _se_proj_bn_kernel(se_ref, w1_ref, b1_ref, x_ref, w2_ref, gamma_ref, beta_ref, o_ref):
    # --- conv2d122 (1x1, with bias) + sigmoid: tiny M=1 matmul, f32 ---
    gate = jnp.dot(se_ref[...], w1_ref[...], preferred_element_type=jnp.float32)
    gate = jax.nn.sigmoid(gate + b1_ref[...])                          # [1, C_mid] f32

    # --- operator.mul folded into the projection weights (per-input-channel scale),
    #     done directly in bf16 (w2 already bf16; gate rounded once) ---
    w2g = w2_ref[...] * gate.astype(jnp.bfloat16)                      # [co_blk, C_mid] bf16

    # --- features: in-kernel cast to bf16 (no-op if the producer already emitted bf16) ---
    x = x_ref[...].astype(jnp.bfloat16)                                # [C_mid, P]

    # --- conv2d123 (1x1, no bias) as a channel-transposed MXU matmul:
    #     z[o, p] = sum_c w2g[o, c] * x[c, p]   (bf16 x bf16 -> f32 accumulate) ---
    z = jax.lax.dot_general(
        w2g, x,
        dimension_numbers=(((1,), (0,)), ((), ())),
        preferred_element_type=jnp.float32,
    )                                                                  # [co_blk, P] f32

    # --- batchnorm2d83 (training mode): per-channel batch stats over lanes.
    #     Two-pass centered variance (never negative); affine folded into scale. ---
    mean = jnp.mean(z, axis=-1, keepdims=True)                         # [co_blk, 1]
    centered = z - mean
    var = jnp.mean(centered * centered, axis=-1, keepdims=True)        # biased variance
    scale = gamma_ref[...] * jax.lax.rsqrt(var + BN_EPS)               # [co_blk, 1]
    o_ref[...] = centered * scale + beta_ref[...]


def _num_tensorcores() -> int:
    # v7x has 2 TensorCores per chip; v5e/v6e have 1.  Splitting C_out only pays when the
    # "parallel" grid axis can actually be sharded across cores.
    try:
        kind = jax.devices()[0].device_kind.lower()
    except Exception:
        return 1
    return 2 if "v7" in kind else 1


def _round_up(x: int, m: int) -> int:
    return (x + m - 1) // m * m


def prepare_params(w1, b1, w2, gamma, beta, n_co=None):
    """One-time parameter preparation (call at init, NOT per forward).

    w1:   [C_se, C_mid]  conv2d122 weight (1x1 squeezed, transposed to (in, out))
    b1:   [C_mid]        conv2d122 bias
    w2:   [C_out, C_mid] conv2d123 weight (1x1 squeezed, PyTorch-native (out, in))
    gamma, beta: [C_out] BatchNorm affine params
    """
    if n_co is None:
        n_co = _num_tensorcores()
    C_out, C_mid = w2.shape
    C_se = w1.shape[0]

    if n_co > 1:
        # co_blk must be a multiple of 16 (bf16 sublane packing of the w2 block) and of 8
        # (f32 output block); 16 covers both.
        co_blk = _round_up(pl.cdiv(C_out, n_co), 16)
        C_out_pad = co_blk * n_co
    else:
        co_blk = C_out
        C_out_pad = C_out
    pad = C_out_pad - C_out

    w2_f = jnp.asarray(w2, jnp.float32)
    gamma_f = jnp.asarray(gamma, jnp.float32)
    beta_f = jnp.asarray(beta, jnp.float32)
    if pad:
        w2_f = jnp.pad(w2_f, ((0, pad), (0, 0)))
        gamma_f = jnp.pad(gamma_f, (0, pad), constant_values=1.0)
        beta_f = jnp.pad(beta_f, (0, pad))

    return dict(
        w1=jnp.asarray(w1, jnp.float32),                   # [C_se, C_mid]
        b1=jnp.asarray(b1, jnp.float32).reshape(1, C_mid),  # [1, C_mid]
        w2=w2_f.astype(jnp.bfloat16),                       # [C_out_pad, C_mid]  (one-time bf16)
        gamma=gamma_f.reshape(C_out_pad, 1),                 # [C_out_pad, 1]
        beta=beta_f.reshape(C_out_pad, 1),                   # [C_out_pad, 1]
        n_co=n_co, co_blk=co_blk, c_out=C_out, c_out_pad=C_out_pad,
        c_se=C_se, c_mid=C_mid,
    )


def se_project_bn(x393, x390, params):
    """Forward of module M.

    x393: [N, C_se, 1, 1]   squeezed SE vector
    x390: [N, C_mid, H, W]  features (NCHW), N must be 1
    params: output of prepare_params()
    Returns [N, C_out, H, W] float32.
    """
    N, C_mid, H, W = x390.shape
    assert N == 1, "module is defined for batch size 1 (single SE gate vector)"
    assert C_mid == params["c_mid"]
    C_se = x393.shape[1]
    P = H * W

    n_co, co_blk = params["n_co"], params["co_blk"]
    C_out, C_out_pad = params["c_out"], params["c_out_pad"]

    # Channels-on-sublane views: pure reshapes, no HBM transpose/convert passes.
    se_row = x393.reshape(1, C_se).astype(jnp.float32)
    x_cp = x390.reshape(C_mid, P)                     # native dtype; cast to bf16 in-kernel

    out_cp = pl.pallas_call(
        _se_proj_bn_kernel,
        out_shape=jax.ShapeDtypeStruct((C_out_pad, P), jnp.float32),
        grid=(n_co,),
        in_specs=[
            pl.BlockSpec((1, C_se), lambda i: (0, 0)),         # se vector
            pl.BlockSpec((C_se, C_mid), lambda i: (0, 0)),     # conv2d122 weight
            pl.BlockSpec((1, C_mid), lambda i: (0, 0)),        # conv2d122 bias
            pl.BlockSpec((C_mid, P), lambda i: (0, 0)),        # features (channels on sublanes)
            pl.BlockSpec((co_blk, C_mid), lambda i: (i, 0)),   # conv2d123 weight slice (bf16)
            pl.BlockSpec((co_blk, 1), lambda i: (i, 0)),       # BN gamma slice
            pl.BlockSpec((co_blk, 1), lambda i: (i, 0)),       # BN beta slice
        ],
        out_specs=pl.BlockSpec((co_blk, P), lambda i: (i, 0)),
        compiler_params=pltpu.CompilerParams(
            dimension_semantics=("parallel",)),                # v7x: one C_out half per TC
    )(se_row, params["w1"], params["b1"], x_cp, params["w2"], params["gamma"], params["beta"])

    # Drop pad channels; [C_out, P] -> [1, C_out, H, W] is a pure reshape.
    return out_cp[:C_out].reshape(N, C_out, H, W)


if __name__ == "__main__":
    # Scaled-down shapes consistent with the module's forward.
    # Original: N=1, C_se=44, C_mid=1056, C_out=176, H=W=14.
    N, C_se, C_mid, C_out, H, W = 1, 8, 64, 24, 8, 8
    P = H * W

    key = jax.random.PRNGKey(0)
    k1, k2, k3, k4, k5, k6, k7 = jax.random.split(key, 7)

    # inputs
    x390 = jax.random.normal(k1, (N, C_mid, H, W), jnp.float32)   # features
    x393 = jax.random.normal(k2, (N, C_se, 1, 1), jnp.float32)    # squeezed SE vector

    # parameters (deterministic init)
    w1 = 0.1 * jax.random.normal(k3, (C_se, C_mid), jnp.float32)      # conv2d122 weight (in,out)
    b1 = 0.1 * jax.random.normal(k4, (C_mid,), jnp.float32)           # conv2d122 bias
    w2 = 0.1 * jax.random.normal(k5, (C_out, C_mid), jnp.float32)     # conv2d123 weight (out,in)
    gamma = 1.0 + 0.1 * jax.random.normal(k6, (C_out,), jnp.float32)  # BN weight
    beta = 0.1 * jax.random.normal(k7, (C_out,), jnp.float32)         # BN bias

    # ---- reference 1: mirrors the kernel's bf16 operand path ----
    gate = jax.nn.sigmoid(x393.reshape(1, C_se) @ w1 + b1[None, :])        # f32 [1, C_mid]
    x_bf = x390.reshape(C_mid, P).astype(jnp.bfloat16)
    w2g_bf = w2.astype(jnp.bfloat16) * gate.astype(jnp.bfloat16)           # bf16 gate fold
    z = jax.lax.dot_general(w2g_bf, x_bf, (((1,), (0,)), ((), ())),
                            preferred_element_type=jnp.float32)
    mean = jnp.mean(z, axis=-1, keepdims=True)
    centered = z - mean
    var = jnp.mean(centered * centered, axis=-1, keepdims=True)
    scale = gamma[:, None] * jax.lax.rsqrt(var + BN_EPS)
    ref_bf = (centered * scale + beta[:, None]).reshape(N, C_out, H, W)

    # ---- reference 2: original full-f32 module semantics ----
    y32 = x390.reshape(C_mid, P) * gate.reshape(C_mid, 1)
    z32 = jnp.dot(w2, y32, precision=jax.lax.Precision.HIGHEST)
    mean32 = jnp.mean(z32, axis=-1, keepdims=True)
    var32 = jnp.mean(jnp.square(z32 - mean32), axis=-1, keepdims=True)
    ref32 = gamma[:, None] * (z32 - mean32) * jax.lax.rsqrt(var32 + BN_EPS) + beta[:, None]
    ref32 = ref32.reshape(N, C_out, H, W)

    # Test the auto (chip-dependent) split, the single-TC path, and the padded dual-TC path
    # (n_co=2 pads C_out 24 -> 32, exercising the multi-block + pad-slice code).
    configs = [("auto", None), ("single", 1), ("split2", 2)]
    for name, n_co in configs:
        params = prepare_params(w1, b1, w2, gamma, beta, n_co=n_co)
        out = jax.block_until_ready(se_project_bn(x393, x390, params))
        assert out.shape == (N, C_out, H, W), (name, out.shape)
        err1 = float(jnp.max(jnp.abs(out - ref_bf)))
        err2 = float(jnp.max(jnp.abs(out - ref32)))
        assert jnp.allclose(out, ref_bf, atol=1e-2, rtol=1e-2), (name, err1)
        assert jnp.allclose(out, ref32, atol=5e-2, rtol=5e-2), (name, err2)

    print("KERNEL_OK")
</pallas_src>

<mosaic_0001>
module attributes {stable_mosaic.version = 11 : i64} {
  func.func @_se_proj_bn_kernel(%arg0: i32, %arg1: memref<1x8xf32, #tpu.memory_space<vmem>>, %arg2: memref<8x64xf32, #tpu.memory_space<vmem>>, %arg3: memref<1x64xf32, #tpu.memory_space<vmem>>, %arg4: memref<64x64xf32, #tpu.memory_space<vmem>>, %arg5: memref<24x64xbf16, #tpu.memory_space<vmem>>, %arg6: memref<24x1xf32, #tpu.memory_space<vmem>>, %arg7: memref<24x1xf32, #tpu.memory_space<vmem>>, %arg8: memref<24x64xf32, #tpu.memory_space<vmem>>) attributes {dimension_semantics = [#tpu.dimension_semantics<parallel>], iteration_bounds = array<i64: 1>, scalar_prefetch = 0 : i64, scratch_operands = 0 : i64, tpu.core_type = #tpu.core_type<tc>, window_params = [{pipeline_mode = #tpu.pipeline_mode<synchronous>, transform_indices = @transform_0, window_bounds = array<i64: 1, 8>}, {pipeline_mode = #tpu.pipeline_mode<synchronous>, transform_indices = @transform_1, window_bounds = array<i64: 8, 64>}, {pipeline_mode = #tpu.pipeline_mode<synchronous>, transform_indices = @transform_2, window_bounds = array<i64: 1, 64>}, {pipeline_mode = #tpu.pipeline_mode<synchronous>, transform_indices = @transform_3, window_bounds = array<i64: 64, 64>}, {transform_indices = @transform_4, window_bounds = array<i64: 24, 64>}, {transform_indices = @transform_5, window_bounds = array<i64: 24, 1>}, {transform_indices = @transform_6, window_bounds = array<i64: 24, 1>}, {transform_indices = @transform_7, window_bounds = array<i64: 24, 64>}]} {
    %c0 = arith.constant 0 : index
    %c0_0 = arith.constant 0 : index
    %0 = vector.load %arg1[%c0, %c0_0] : memref<1x8xf32, #tpu.memory_space<vmem>>, vector<1x8xf32>
    %c0_1 = arith.constant 0 : index
    %c0_2 = arith.constant 0 : index
    %1 = vector.load %arg2[%c0_1, %c0_2] : memref<8x64xf32, #tpu.memory_space<vmem>>, vector<8x64xf32>
    %cst = arith.constant dense<0.000000e+00> : vector<1x64xf32>
    %2 = tpu.matmul %0, %1, %cst {dimension_numbers = #tpu.dot_dimension_numbers<[1], [0], [0], [1], [0, 0, 1, 1], [], []>} : vector<1x8xf32>, vector<8x64xf32>, vector<1x64xf32> -> vector<1x64xf32>
    %c0_3 = arith.constant 0 : index
    %c0_4 = arith.constant 0 : index
    %3 = vector.load %arg3[%c0_3, %c0_4] : memref<1x64xf32, #tpu.memory_space<vmem>>, vector<1x64xf32>
    %4 = arith.addf %2, %3 : vector<1x64xf32>
    %5 = arith.negf %4 : vector<1x64xf32>
    %6 = math.exp %5 : vector<1x64xf32>
    %cst_5 = arith.constant 1.000000e+00 : f32
    %7 = vector.broadcast %cst_5 : f32 to vector<1x64xf32>
    %8 = arith.addf %7, %6 : vector<1x64xf32>
    %9 = arith.divf %7, %8 : vector<1x64xf32>
    %c0_6 = arith.constant 0 : index
    %c0_7 = arith.constant 0 : index
    %10 = vector.load %arg5[%c0_6, %c0_7] : memref<24x64xbf16, #tpu.memory_space<vmem>>, vector<24x64xbf16>
    %11 = arith.truncf %9 : vector<1x64xf32> to vector<1x64xbf16>
    %12 = vector.broadcast %11 : vector<1x64xbf16> to vector<24x64xbf16>
    %13 = arith.mulf %10, %12 : vector<24x64xbf16>
    %c0_8 = arith.constant 0 : index
    %c0_9 = arith.constant 0 : index
    %14 = vector.load %arg4[%c0_8, %c0_9] : memref<64x64xf32, #tpu.memory_space<vmem>>, vector<64x64xf32>
    %15 = arith.truncf %14 : vector<64x64xf32> to vector<64x64xbf16>
    %cst_10 = arith.constant dense<0.000000e+00> : vector<24x64xf32>
    %16 = tpu.matmul %13, %15, %cst_10 {dimension_numbers = #tpu.dot_dimension_numbers<[1], [0], [0], [1], [0, 0, 1, 1], [], []>} : vector<24x64xbf16>, vector<64x64xbf16>, vector<24x64xf32> -> vector<24x64xf32>
    %cst_11 = arith.constant dense<0.000000e+00> : vector<24xf32>
    %17 = vector.multi_reduction <add>, %16, %cst_11 [1] : vector<24x64xf32> to vector<24xf32>
    %18 = vector.shape_cast %17 : vector<24xf32> to vector<24x1xf32>
    %cst_12 = arith.constant 6.400000e+01 : f32
    %19 = vector.broadcast %cst_12 : f32 to vector<24x1xf32>
    %20 = arith.divf %18, %19 : vector<24x1xf32>
    %21 = vector.broadcast %20 : vector<24x1xf32> to vector<24x64xf32>
    %22 = arith.subf %16, %21 : vector<24x64xf32>
    %23 = arith.mulf %22, %22 : vector<24x64xf32>
    %cst_13 = arith.constant dense<0.000000e+00> : vector<24xf32>
    %24 = vector.multi_reduction <add>, %23, %cst_13 [1] : vector<24x64xf32> to vector<24xf32>
    %25 = vector.shape_cast %24 : vector<24xf32> to vector<24x1xf32>
    %cst_14 = arith.constant 6.400000e+01 : f32
    %26 = vector.broadcast %cst_14 : f32 to vector<24x1xf32>
    %27 = arith.divf %25, %26 : vector<24x1xf32>
    %c0_15 = arith.constant 0 : index
    %c0_16 = arith.constant 0 : index
    %28 = vector.load %arg6[%c0_15, %c0_16] : memref<24x1xf32, #tpu.memory_space<vmem>>, vector<24x1xf32>
    %cst_17 = arith.constant 1.000000e-03 : f32
    %29 = vector.broadcast %cst_17 : f32 to vector<24x1xf32>
    %30 = arith.addf %27, %29 : vector<24x1xf32>
    %31 = math.rsqrt %30 : vector<24x1xf32>
    %32 = arith.mulf %28, %31 : vector<24x1xf32>
    %33 = vector.broadcast %32 : vector<24x1xf32> to vector<24x64xf32>
    %34 = arith.mulf %22, %33 : vector<24x64xf32>
    %c0_18 = arith.constant 0 : index
    %c0_19 = arith.constant 0 : index
    %35 = vector.load %arg7[%c0_18, %c0_19] : memref<24x1xf32, #tpu.memory_space<vmem>>, vector<24x1xf32>
    %36 = vector.broadcast %35 : vector<24x1xf32> to vector<24x64xf32>
    %37 = arith.addf %34, %36 : vector<24x64xf32>
    %c0_20 = arith.constant 0 : index
    %c0_21 = arith.constant 0 : index
    %38 = vector.load %arg8[%c0_20, %c0_21] : memref<24x64xf32, #tpu.memory_space<vmem>>, vector<24x64xf32>
    tpu.vector_store %arg8[%c0_20, %c0_21], %37 {strides = array<i32>} : memref<24x64xf32, #tpu.memory_space<vmem>>, vector<24x64xf32>,
    return
  }
  func.func @transform_0(%arg0: i32) -> (i32, i32) {
    %c0_i32 = arith.constant 0 : i32
    %c0_i32_0 = arith.constant 0 : i32
    %c0_i32_1 = arith.constant 0 : i32
    return %c0_i32, %c0_i32_0 : i32, i32
  }
  func.func @transform_1(%arg0: i32) -> (i32, i32) {
    %c0_i32 = arith.constant 0 : i32
    %c0_i32_0 = arith.constant 0 : i32
    %c0_i32_1 = arith.constant 0 : i32
    return %c0_i32, %c0_i32_0 : i32, i32
  }
  func.func @transform_2(%arg0: i32) -> (i32, i32) {
    %c0_i32 = arith.constant 0 : i32
    %c0_i32_0 = arith.constant 0 : i32
    %c0_i32_1 = arith.constant 0 : i32
    return %c0_i32, %c0_i32_0 : i32, i32
  }
  func.func @transform_3(%arg0: i32) -> (i32, i32) {
    %c0_i32 = arith.constant 0 : i32
    %c0_i32_0 = arith.constant 0 : i32
    %c0_i32_1 = arith.constant 0 : i32
    return %c0_i32, %c0_i32_0 : i32, i32
  }
  func.func @transform_4(%arg0: i32) -> (i32, i32) {
    %c0_i32 = arith.constant 0 : i32
    %c0_i32_0 = arith.constant 0 : i32
    return %arg0, %c0_i32 : i32, i32
  }
  func.func @transform_5(%arg0: i32) -> (i32, i32) {
    %c0_i32 = arith.constant 0 : i32
    %c0_i32_0 = arith.constant 0 : i32
    return %arg0, %c0_i32 : i32, i32
  }
  func.func @transform_6(%arg0: i32) -> (i32, i32) {
    %c0_i32 = arith.constant 0 : i32
    %c0_i32_0 = arith.constant 0 : i32
    return %arg0, %c0_i32 : i32, i32
  }
  func.func @transform_7(%arg0: i32) -> (i32, i32) {
    %c0_i32 = arith.constant 0 : i32
    %c0_i32_0 = arith.constant 0 : i32
    return %arg0, %c0_i32 : i32, i32
  }
}

</mosaic_0001>

<llo_original>
// kernel: tpu_custom_call.1
$region0: #{tpu_custom_call.1}
  #allocation0 [shape = 'u32[]', space=smem, size = 0x4, offset = 0x4, fixed_abs, tag = 'smem constant byte address 0x4 - core index']
  #allocation1 [shape = 'u32[144,128]{1,0:T(1,128)}', space=vmem, size = 0x12000, scoped, tag = 'internal scratch']
  %s0 = inlined_call_operand.vmem [shape: f32[1,8], index: 0, kind: input, shape index: {}]
  %s1 = inlined_call_operand.vmem [shape: f32[8,64], index: 1, kind: input, shape index: {}]
  %s2 = inlined_call_operand.vmem [shape: f32[1,64], index: 2, kind: input, shape index: {}]
  %s3 = inlined_call_operand.hbm [shape: f32[64,64], index: 3, kind: input, shape index: {}]
  %s4 = inlined_call_operand.vmem [shape: bf16[24,64], index: 4, kind: input, shape index: {}]
  %s5 = inlined_call_operand.vmem [shape: f32[24,1], index: 5, kind: input, shape index: {}]
  %s6 = inlined_call_operand.vmem [shape: f32[24,1], index: 6, kind: input, shape index: {}]
  %s7 = inlined_call_operand.hbm [shape: f32[24,64], index: 7, kind: output, shape index: {}]
  %s8 = sld [smem:[#allocation0]]
  $region42: #{tpu_custom_call.1} parent=0
    _
  %s10 = ssub.s32 1, %s8
  %s11 = scalar_select 0, %s10, %s8
  $region1: #{tpu_custom_call.1} parent=0
    #allocation2 [shape = 'u8[32768]{0}', space=vmem, size = 0x8000, scoped, tag = 'input window, operand 3, single buffered']
    #allocation3 [shape = 's32[1]{0}', space=sflag, size = 0x4, scoped, tag = 'scoped memory for tpu_custom_call.1']
    #allocation4 [shape = 's32[1]{0}', space=sflag, size = 0x4, scoped, tag = 'scoped memory for tpu_custom_call.1']
    #allocation5 [shape = 'u8[12288]{0}', space=vmem, size = 0x3000, scoped, tag = 'output window, operand 0, single buffered']
    %12 = vsyncpa [#allocation3], 0
    %13 = vsyncpa [#allocation4], 0
    // Predicated region
    $region2: #{tpu_custom_call.1} parent=1 // pred_check
      _
    $region3: #{tpu_custom_call.1} parent=1 // pred_check_branch
      %15 = sbr.rel (0) target = $region5
    $region4: #{tpu_custom_call.1} parent=1 // pred_region
      _
    $region5: #{tpu_custom_call.1} parent=1 // pred_fallthru
      _
    // Predicated region
    $region6: #{tpu_custom_call.1} parent=1 // pred_check
      _
    $region7: #{tpu_custom_call.1} parent=1 // pred_check_branch
      %17 = sbr.rel (0) target = $region9
    $region8: #{tpu_custom_call.1} parent=1 // pred_region
      _
    $region9: #{tpu_custom_call.1} parent=1 // pred_fallthru
      _
    // Predicated region
    $region10: #{tpu_custom_call.1} parent=1 // pred_check
      _
    $region11: #{tpu_custom_call.1} parent=1 // pred_check_branch
      %19 = sbr.rel (0) target = $region13
    $region12: #{tpu_custom_call.1} parent=1 // pred_region
      _
    $region13: #{tpu_custom_call.1} parent=1 // pred_fallthru
      _
    // Predicated region
    $region14: #{tpu_custom_call.1} parent=1 // pred_check
      _
    $region15: #{tpu_custom_call.1} parent=1 // pred_check_branch
      %21 = sbr.rel (0) target = $region17
    $region16: #{tpu_custom_call.1} parent=1 // pred_region
      %s23 = ssub.s32 1024, 1024
      %24 = vsyncadd [#allocation3], %s23
      %s25 = sshll.u32 [#allocation2], 4
      %s26 = int_to_ptr.vmem [resolvable:$true] %s25
      %31 = dma.hbm_to_vmem [thread:$0]  %s3, 1024, %s26, [#allocation3], 128, 128, 8
    $region17: #{tpu_custom_call.1} parent=1 // pred_fallthru
      _
    // Predicated region
    $region18: #{tpu_custom_call.1} parent=1 // pred_check
      _
    $region19: #{tpu_custom_call.1} parent=1 // pred_check_branch
      %33 = sbr.rel (0) target = $region21
    $region20: #{tpu_custom_call.1} parent=1 // pred_region
      _
    $region21: #{tpu_custom_call.1} parent=1 // pred_fallthru
      _
    // Predicated region
    $region22: #{tpu_custom_call.1} parent=1 // pred_check
      _
    $region23: #{tpu_custom_call.1} parent=1 // pred_check_branch
      %35 = sbr.rel (0) target = $region25
    $region24: #{tpu_custom_call.1} parent=1 // pred_region
      _
    $region25: #{tpu_custom_call.1} parent=1 // pred_fallthru
      _
    // Predicated region
    $region26: #{tpu_custom_call.1} parent=1 // pred_check
      _
    $region27: #{tpu_custom_call.1} parent=1 // pred_check_branch
      %37 = sbr.rel (0) target = $region29
    $region28: #{tpu_custom_call.1} parent=1 // pred_region
      _
    $region29: #{tpu_custom_call.1} parent=1 // pred_fallthru
      _
    // Predicated region
    $region30: #{tpu_custom_call.1} parent=1 // pred_check
      _
    $region31: #{tpu_custom_call.1} parent=1 // pred_check_branch
      %39 = sbr.rel (0) target = $region33
    $region32: #{tpu_custom_call.1} parent=1 // pred_region
      %40 = dma.done [#allocation3], 1024
    $region33: #{tpu_custom_call.1} parent=1 // pred_fallthru
      _
    %v42 = vld [vmem:[%s0] sm:$0x1]
    %v43 = vld [vmem:[%s1] sm:$0xff]
    %v44 = vld [vmem:[%s2] sm:$0x1]
    %vm45 = vcmask 64512
    %v47 = vsel %vm45, %v42, 0
    %49 = vmatprep.subr.mxu0 0.0
    %50 = vmatpush1.msra.mxu0 %v43
    %51 = vmatprep.subr.mxu0 0.0
    %52 = vmatpush1.msra.mxu0 0.0
    %53 = vmatprep.subr.mxu0 0.0
    %54 = vmatpush1.msra.mxu0 0.0
    %55 = vmatprep.subr.mxu0 0.0
    %56 = vmatpush1.msra.mxu0 0.0
    %57 = vmatprep.subr.mxu0 0.0
    %58 = vmatpush1.msra.mxu0 0.0
    %59 = vmatprep.subr.mxu0 0.0
    %60 = vmatpush1.msra.mxu0 0.0
    %61 = vmatprep.subr.mxu0 0.0
    %62 = vmatpush1.msra.mxu0 0.0
    %63 = vmatprep.subr.mxu0 0.0
    %64 = vmatpush1.msra.mxu0 0.0
    %65 = vmatprep.subr.mxu0 0.0
    %66 = vmatpush1.msra.mxu0 0.0
    %67 = vmatprep.subr.mxu0 0.0
    %68 = vmatpush1.msra.mxu0 0.0
    %69 = vmatprep.subr.mxu0 0.0
    %70 = vmatpush1.msra.mxu0 0.0
    %71 = vmatprep.subr.mxu0 0.0
    %72 = vmatpush1.msra.mxu0 0.0
    %73 = vmatprep.subr.mxu0 0.0
    %74 = vmatpush1.msra.mxu0 0.0
    %75 = vmatprep.subr.mxu0 0.0
    %76 = vmatpush1.msra.mxu0 0.0
    %77 = vmatprep.subr.mxu0 0.0
    %78 = vmatpush1.msra.mxu0 0.0
    %79 = vmatprep.subr.mxu0 0.0
    %80 = vmatpush1.msra.mxu0 0.0
    %81 = vmatprep.subr.mxu0 0.0
    %82 = vmatpush1.msra.mxu0 0.0
    %83 = vmatprep.subr.mxu0 0.0
    %84 = vmatpush1.msra.mxu0 0.0
    %85 = vmatprep.subr.mxu0 0.0
    %86 = vmatpush1.msra.mxu0 0.0
    %87 = vmatprep.subr.mxu0 0.0
    %88 = vmatpush1.msra.mxu0 0.0
    %89 = vmatprep.subr.mxu0 0.0
    %90 = vmatpush1.msra.mxu0 0.0
    %91 = vmatprep.subr.mxu0 0.0
    %92 = vmatpush1.msra.mxu0 0.0
    %93 = vmatprep.subr.mxu0 0.0
    %94 = vmatpush1.msra.mxu0 0.0
    %95 = vmatprep.subr.mxu0 0.0
    %96 = vmatpush1.msra.mxu0 0.0
    %97 = vmatprep.subr.mxu0 0.0
    %98 = vmatpush1.msra.mxu0 0.0
    %99 = vmatprep.subr.mxu0 0.0
    %100 = vmatpush1.msra.mxu0 0.0
    %101 = vmatprep.subr.mxu0 0.0
    %102 = vmatpush1.msra.mxu0 0.0
    %103 = vmatprep.subr.mxu0 0.0
    %104 = vmatpush1.msra.mxu0 0.0
    %105 = vmatprep.subr.mxu0 0.0
    %106 = vmatpush1.msra.mxu0 0.0
    %107 = vmatprep.subr.mxu0 0.0
    %108 = vmatpush1.msra.mxu0 0.0
    %109 = vmatprep.subr.mxu0 0.0
    %110 = vmatpush1.msra.mxu0 0.0
    %111 = vmatprep.subr.mxu0 0.0
    %112 = vmatpush1.msra.mxu0 0.0
    %113 = vmatprep.mubr.f32.mxu0 0.0
    %114 = vmatmul.mubr.f32.gmra.mrb[0].mxu0 %v47
    %v115 = vpop.f32.mrb[0].mxu0
    %v116 = vadd.f32 %v44, %v115
    %v117 = vpop.f32.mrb[0].mxu0
    %118 = vdwg.mxu0
    %v119 = vxor.u32 %v116, 2147483648
    %v120 = vmul.f32 %v119, 1.442695
    %v121 = vpow.pop %v120
    %v122 = vadd.f32 %v121, 1.0
    %v123 = vrcp.pop %v122
    %v124 = vmul.f32 1.0, %v123
    %v125 = vld [vmem:[%s4] sm:$0xf]
    %v126 = vld [vmem:[%s4 + $0x4] sm:$0xf]
    %v127 = vld [vmem:[%s4 + $0x8] sm:$0xf]
    %v128 = vpack.c.bf16 %v124, %v124
    %v130 = vpack.i.b16 %v128, %v128
    %v132 = vlaneseq
    %v133 = vshrl.u32 %v132, 7
    %v134 = vsub.s32 0, %v133
    %v135 = vrot.slane %v130, %v134
    %v137 = vunpack.c.l.b16 %v135
    %v138 = vpack.c.b16 %v137, %v137
    %v140 = vmul.bf16 %v125, %v138
    %v141 = vmul.bf16 %v126, %v138
    %v142 = vmul.bf16 %v127, %v138
    %v143 = vld [vmem:[#allocation2] sm:$0xff]
    %v144 = vld [vmem:[#allocation2 + $0x8] sm:$0xff]
    %v145 = vld [vmem:[#allocation2 + $0x10] sm:$0xff]
    %v146 = vld [vmem:[#allocation2 + $0x18] sm:$0xff]
    %v147 = vld [vmem:[#allocation2 + $0x20] sm:$0xff]
    %v148 = vld [vmem:[#allocation2 + $0x28] sm:$0xff]
    %v149 = vld [vmem:[#allocation2 + $0x30] sm:$0xff]
    %v150 = vld [vmem:[#allocation2 + $0x38] sm:$0xff]
    %v151 = vpack.c.bf16 %v144, %v143
    %v152 = vpack.c.bf16 %v146, %v145
    %v153 = vpack.c.bf16 %v148, %v147
    %v154 = vpack.c.bf16 %v150, %v149
    %v158 = vunpack.c.l.b16 %v140
    %v159 = vunpack.c.l.b16 %v141
    %v160 = vunpack.c.l.b16 %v142
    %v161 = vpack.c.b16 %v159, %v158
    %v162 = vpack.c.b16 %v160, %v160
    %vm163 = vcmask 523264
    %v165 = vsel %vm163, %v161, 0
    %v168 = vsel %vm163, %v162, 0
    %170 = vmatprep.subr.bf16.mxu0 0
    %171 = vmatpush1.bf16.msra.mxu0 %v151
    %172 = vmatprep.subr.bf16.mxu0 0
    %173 = vmatpush1.bf16.msra.mxu0 %v152
    %174 = vmatprep.subr.bf16.mxu0 0
    %175 = vmatpush1.bf16.msra.mxu0 %v153
    %176 = vmatprep.subr.bf16.mxu0 0
    %177 = vmatpush1.bf16.msra.mxu0 %v154
    %178 = vmatprep.subr.bf16.mxu0 0
    %179 = vmatpush1.bf16.msra.mxu0 0
    %180 = vmatprep.subr.bf16.mxu0 0
    %181 = vmatpush1.bf16.msra.mxu0 0
    %182 = vmatprep.subr.bf16.mxu0 0
    %183 = vmatpush1.bf16.msra.mxu0 0
    %184 = vmatprep.subr.bf16.mxu0 0
    %185 = vmatpush1.bf16.msra.mxu0 0
    %186 = vmatprep.subr.bf16.mxu0 0
    %187 = vmatpush1.bf16.msra.mxu0 0
    %188 = vmatprep.subr.bf16.mxu0 0
    %189 = vmatpush1.bf16.msra.mxu0 0
    %190 = vmatprep.subr.bf16.mxu0 0
    %191 = vmatpush1.bf16.msra.mxu0 0
    %192 = vmatprep.subr.bf16.mxu0 0
    %193 = vmatpush1.bf16.msra.mxu0 0
    %194 = vmatprep.subr.bf16.mxu0 0
    %195 = vmatpush1.bf16.msra.mxu0 0
    %196 = vmatprep.subr.bf16.mxu0 0
    %197 = vmatpush1.bf16.msra.mxu0 0
    %198 = vmatprep.subr.bf16.mxu0 0
    %199 = vmatpush1.bf16.msra.mxu0 0
    %200 = vmatprep.subr.bf16.mxu0 0
    %201 = vmatpush1.bf16.msra.mxu0 0
    %202 = vmatprep.mubr.bf16.mxu0 0
    %203 = vmatmul.mubr.bf16.gmra.mrb[0].mxu0 %v165
    %v204 = vpop.f32.mrb[0].mxu0
    %v205 = vadd.f32 0.0, %v204
    %v206 = vpop.f32.mrb[0].mxu0
    %v207 = vpop.f32.mrb[0].mxu0
    %v208 = vadd.f32 0.0, %v207
    %v209 = vpop.f32.mrb[0].mxu0
    %210 = vmatprep.mubr.bf16.mxu0 0
    %211 = vmatmul.mubr.bf16.gmra.mrb[0].mxu0 %v168
    %v212 = vpop.f32.mrb[0].mxu0
    %v213 = vadd.f32 0.0, %v212
    %v214 = vpop.f32.mrb[0].mxu0
    %v215 = vpop.f32.mrb[0].mxu0
    %v216 = vpop.f32.mrb[0].mxu0
    %217 = vdwg.mxu0
    %v218 = vsel %vm163, %v205, 0.0
    %219 = vadd.xlane.f32.xlu0 %v218
    %v220 = vpop.xlane.xlu0 %219
    %v221 = vsel %vm163, %v208, 0.0
    %222 = vadd.xlane.f32.xlu0 %v221
    %v223 = vpop.xlane.xlu0 %222
    %v224 = vsel %vm163, %v213, 0.0
    %225 = vadd.xlane.f32.xlu0 %v224
    %v226 = vpop.xlane.xlu0 %225
    %v227 = vrcp.pop 64.0
    %v228 = vmul.f32 %v220, %v227
    %v229 = vmul.f32 %v223, %v227
    %v230 = vmul.f32 %v226, %v227
    %v231 = vsub.f32 %v205, %v228
    %v232 = vsub.f32 %v208, %v229
    %v233 = vsub.f32 %v213, %v230
    %v234 = vmul.f32 %v231, %v231
    %v235 = vmul.f32 %v232, %v232
    %v236 = vmul.f32 %v233, %v233
    %v237 = vsel %vm163, %v234, 0.0
    %238 = vadd.xlane.f32.xlu0 %v237
    %v239 = vpop.xlane.xlu0 %238
    %v240 = vsel %vm163, %v235, 0.0
    %241 = vadd.xlane.f32.xlu0 %v240
    %v242 = vpop.xlane.xlu0 %241
    %v243 = vsel %vm163, %v236, 0.0
    %244 = vadd.xlane.f32.xlu0 %v243
    %v245 = vpop.xlane.xlu0 %244
    %v246 = vmul.f32 %v239, %v227
    %v247 = vmul.f32 %v242, %v227
    %v248 = vmul.f32 %v245, %v227
    %v249 = vld [vmem:[%s5] sm:$0xff]
    %v250 = vld [vmem:[%s5 + $0x8] sm:$0xff]
    %v251 = vld [vmem:[%s5 + $0x10] sm:$0xff]
    %v252 = vadd.f32 %v246, 0.001
    %v253 = vadd.f32 %v247, 0.001
    %v254 = vadd.f32 %v248, 0.001
    %v255 = vrsqrt.pop %v252
    %v256 = vrsqrt.pop %v253
    %v257 = vrsqrt.pop %v254
    %v258 = vmul.f32 %v249, %v255
    %v259 = vmul.f32 %v250, %v256
    %v260 = vmul.f32 %v251, %v257
    %262 = vset.pattern.permute.xlu0 0
    %263 = vperm.xlu0 %262, %v258
    %v264 = vpop.permute.xlu0 %263
    %267 = vset.pattern.permute.xlu0 0
    %268 = vperm.xlu0 %267, %v259
    %v269 = vpop.permute.xlu0 %268
    %272 = vset.pattern.permute.xlu0 0
    %273 = vperm.xlu0 %272, %v260
    %v274 = vpop.permute.xlu0 %273
    %v276 = vmul.f32 %v231, %v264
    %v277 = vmul.f32 %v232, %v269
    %v278 = vmul.f32 %v233, %v274
    %v279 = vld [vmem:[%s6] sm:$0xff]
    %v280 = vld [vmem:[%s6 + $0x8] sm:$0xff]
    %v281 = vld [vmem:[%s6 + $0x10] sm:$0xff]
    %283 = vset.pattern.permute.xlu0 0
    %284 = vperm.xlu0 %283, %v279
    %v285 = vpop.permute.xlu0 %284
    %288 = vset.pattern.permute.xlu0 0
    %289 = vperm.xlu0 %288, %v280
    %v290 = vpop.permute.xlu0 %289
    %293 = vset.pattern.permute.xlu0 0
    %294 = vperm.xlu0 %293, %v281
    %v295 = vpop.permute.xlu0 %294
    %v297 = vadd.f32 %v276, %v285
    %v298 = vadd.f32 %v277, %v290
    %v299 = vadd.f32 %v278, %v295
    %300 = vst.msk [vmem:[#allocation5] sm:$0xff] %vm163, %v297
    %301 = vst.msk [vmem:[#allocation5 + $0x8] sm:$0xff] %vm163, %v298
    %302 = vst.msk [vmem:[#allocation5 + $0x10] sm:$0xff] %vm163, %v299
    // Predicated region
    $region34: #{tpu_custom_call.1} parent=1 // pred_check
      _
    $region35: #{tpu_custom_call.1} parent=1 // pred_check_branch
      %304 = sbr.rel (0) target = $region37
    $region36: #{tpu_custom_call.1} parent=1 // pred_region
      %s306 = ssub.s32 384, 384
      %307 = vsyncadd [#allocation4], %s306
      %s308 = sshll.u32 [#allocation5], 4
      %s309 = int_to_ptr.vmem [resolvable:$true] %s308
      %314 = dma.vmem_to_hbm [thread:$0]  %s309, 384, %s7, [#allocation4], 128, 128, 8
    $region37: #{tpu_custom_call.1} parent=1 // pred_fallthru
      _
    // Predicated region
    $region38: #{tpu_custom_call.1} parent=1 // pred_check
      _
    $region39: #{tpu_custom_call.1} parent=1 // pred_check_branch
      %316 = sbr.rel (0) target = $region41
    $region40: #{tpu_custom_call.1} parent=1 // pred_region
      %317 = dma.done [#allocation4], 384
    $region41: #{tpu_custom_call.1} parent=1 // pred_fallthru
      _
    %318 = vsyncpa [#allocation3], 1
    %319 = vsyncpa [#allocation4], 1

</llo_original>
